<compile_context>
chip_gen: v7x
topology: tpu7x:2x2x1
jax: 0.10.0
libtpu: 0.0.40
codegen_flags: <defaults>
</compile_context>

<pallas_src>
import functools

import numpy as np

import jax
import jax.numpy as jnp
from jax.experimental import pallas as pl
from jax.experimental.pallas import tpu as pltpu


def _tree_sum(terms):
    terms = list(terms)
    while len(terms) > 1:
        nxt = [a + b for a, b in zip(terms[0::2], terms[1::2])]
        if len(terms) % 2:
            nxt.append(terms[-1])
        terms = nxt
    return terms[0]


def _seblock_kernel(l_ref, w1_ref, w2_ref, wc_ref, idx_ref, o_ref, *,
                    C, Cr, HW, h_scale, ch_rows, n_off):
    # l_ref  : (B_t, C, HW)  VMEM, native dtype   one tile of batches of `l`
    # w1_ref : (Cr, C)       SMEM f32             fc1 weight
    # w2_ref : (C, Cr)       SMEM f32             fc2 weight
    # wc_ref : (C, 1)        VMEM f32             conv1 (1x1) weight, column
    # idx_ref: (n_off, HW)   VMEM int32           (p + off) % C per distinct offset
    # o_ref  : (B_t, C, HW)  VMEM f32             output tile
    x = l_ref[...].astype(jnp.float32)                        # (B_t, C, HW)
    bt = x.shape[0]

    # ---- spatial branch: h * sigmoid(1x1 conv over channels) ----------------
    sse_lin = jnp.sum(x * wc_ref[...][None, :, :], axis=1)     # (B_t, HW)
    sse = h_scale * jax.nn.sigmoid(sse_lin)                    # (B_t, HW)

    # ---- channel branch: h * sigmoid(fc2(relu(fc1(mean)))) -> C scalars/b ----
    means = jnp.sum(x, axis=-1) * (1.0 / float(HW))            # (B_t, C)
    hidden = []
    for j in range(Cr):
        terms = [w1_ref[j, c] * means[:, c:c + 1] for c in range(C)]
        hidden.append(jnp.maximum(_tree_sum(terms), 0.0))      # (B_t, 1)
    cse = []
    for i in range(C):
        terms = [w2_ref[i, j] * hidden[j] for j in range(Cr)]
        cse.append(h_scale * jax.nn.sigmoid(_tree_sum(terms))) # (B_t, 1)

    # ---- faithful repeat(1, H*W).view(...) pattern, deduped over offsets ----
    results = []
    for k in range(n_off):
        idx = idx_ref[pl.ds(k, 1), :]                          # (1, HW) int32
        cmap = jnp.where(idx == 0, cse[0], jnp.float32(0.0))
        for c in range(1, C):
            cmap = jnp.where(idx == c, cse[c], cmap)           # (B_t, HW)
        results.append(cmap + sse)                             # (B_t, HW)

    if n_off == 1:
        # All channels share one map: single dense (B_t, C, HW) store.
        out = jnp.broadcast_to(results[0][:, None, :], (bt, C, HW))
        o_ref[...] = out.astype(o_ref.dtype)
    else:
        for ch in range(C):
            o_ref[:, ch, :] = results[ch_rows[ch]].astype(o_ref.dtype)


def seblock(l, h, fc1_w, fc2_w, conv1_w):
    """Forward of SEblock exactly as the PyTorch module computes it.

    l: (B, C, H, W).  h: second input — only its shape is used (the reference
    forward shadows the tensor with its height).  fc1_w: (C//r, C),
    fc2_w: (C, C//r), conv1_w: (1, C, 1, 1); all bias-free.
    """
    B, C, H, W = l.shape
    _, _, Hh, Wh = h.shape
    Cr = fc1_w.shape[0]
    assert fc1_w.shape == (Cr, C), fc1_w.shape      # needs in_features == out_features
    assert fc2_w.shape == (C, Cr), fc2_w.shape
    assert conv1_w.shape == (1, C, 1, 1), conv1_w.shape
    assert (Hh, Wh) == (H, W), "torch add requires matching spatial dims"
    HW = H * W

    # --- host-side precompute of the batch-invariant repeat/offset pattern ---
    offs = [(ch * HW) % C for ch in range(C)]
    distinct = sorted(set(offs))
    n_off = len(distinct)
    row_of = {o: k for k, o in enumerate(distinct)}
    ch_rows = tuple(row_of[o] for o in offs)
    p = np.arange(HW, dtype=np.int64)
    idx_maps = jnp.asarray(
        np.stack([(p + o) % C for o in distinct]).astype(np.int32))  # (n_off, HW)

    w1 = fc1_w.astype(jnp.float32)
    w2 = fc2_w.astype(jnp.float32)
    wc = conv1_w.reshape(C, 1).astype(jnp.float32)
    l3 = l.reshape(B, C, HW)                     # contiguous NCHW -> free reshape

    # --- batch tiling: ~2 MiB blocks, >=2 grid steps when B > 1 (v7x megacore)
    itemsize = max(jnp.dtype(l.dtype).itemsize, 4)   # f32 internal + f32 output
    bytes_per_batch = C * HW * itemsize
    target_bytes = 2 << 20
    bt = max(1, min(B, target_bytes // max(bytes_per_batch, 1)))
    if B > 1:
        bt = min(bt, max(1, B // 2))
    while B % bt:
        bt -= 1
    grid = (B // bt,)

    kern = functools.partial(_seblock_kernel, C=C, Cr=Cr, HW=HW,
                             h_scale=float(Hh), ch_rows=ch_rows, n_off=n_off)
    out = pl.pallas_call(
        kern,
        out_shape=jax.ShapeDtypeStruct((B, C, HW), jnp.float32),
        grid=grid,
        in_specs=[
            pl.BlockSpec((bt, C, HW), lambda b: (b, 0, 0)),
            pl.BlockSpec(memory_space=pltpu.MemorySpace.SMEM),
            pl.BlockSpec(memory_space=pltpu.MemorySpace.SMEM),
            pl.BlockSpec((C, 1), lambda b: (0, 0)),
            pl.BlockSpec((n_off, HW), lambda b: (0, 0)),
        ],
        out_specs=pl.BlockSpec((bt, C, HW), lambda b: (b, 0, 0)),
        compiler_params=pltpu.CompilerParams(dimension_semantics=("parallel",)),
    )(l3, w1, w2, wc, idx_maps)
    return out.reshape(B, C, H, W)


def _ref_seblock(l, h, fc1_w, fc2_w, conv1_w):
    """Pure-JAX mirror of the PyTorch forward, bug-for-bug."""
    B, Cl, Hl, Wl = l.shape
    mean = jnp.mean(l.reshape(B, Cl, Hl * Wl), axis=2)                # (B, C)
    cse = jax.nn.relu(mean @ fc1_w.T)
    cse = jax.nn.sigmoid(cse @ fc2_w.T)                               # (B, C)
    b, c = cse.shape
    _, _, hh, wh = h.shape                                            # ints (shadowing)
    cse_rep = jnp.tile(cse, (1, hh * wh)).reshape(b, c, hh, wh) * hh
    w1x1 = conv1_w.reshape(-1)                                        # (C,)
    sse = jax.nn.sigmoid(jnp.einsum("bchw,c->bhw", l, w1x1))[:, None]
    sse = jnp.broadcast_to(sse, (b, c, Hl, Wl)) * hh
    return cse_rep + sse


if __name__ == "__main__":
    B, C, H, W = 2, 4, 16, 16
    ratio = 2

    key = jax.random.PRNGKey(0)
    kl, kh, k1, k2, kc = jax.random.split(key, 5)
    l = jax.random.normal(kl, (B, C, H, W), dtype=jnp.float32)
    h = jax.random.normal(kh, (B, C, H, W), dtype=jnp.float32)  # values unused by module
    fc1_w = 0.3 * jax.random.normal(k1, (C // ratio, C), dtype=jnp.float32)
    fc2_w = 0.3 * jax.random.normal(k2, (C, C // ratio), dtype=jnp.float32)
    conv1_w = 0.3 * jax.random.normal(kc, (1, C, 1, 1), dtype=jnp.float32)

    out = seblock(l, h, fc1_w, fc2_w, conv1_w)
    out = jax.block_until_ready(out)

    ref = _ref_seblock(l, h, fc1_w, fc2_w, conv1_w)
    assert out.shape == (B, C, H, W), out.shape
    assert jnp.allclose(out, ref, atol=1e-4, rtol=1e-4), float(jnp.max(jnp.abs(out - ref)))
    print("KERNEL_OK")
</pallas_src>

<mosaic_0001>
module attributes {stable_mosaic.version = 11 : i64} {
  func.func @_seblock_kernel(%arg0: i32, %arg1: memref<1x4x256xf32, #tpu.memory_space<vmem>>, %arg2: memref<2x4xf32, #tpu.memory_space<smem>>, %arg3: memref<4x2xf32, #tpu.memory_space<smem>>, %arg4: memref<4x1xf32, #tpu.memory_space<vmem>>, %arg5: memref<1x256xi32, #tpu.memory_space<vmem>>, %arg6: memref<1x4x256xf32, #tpu.memory_space<vmem>>) attributes {dimension_semantics = [#tpu.dimension_semantics<parallel>], iteration_bounds = array<i64: 2>, scalar_prefetch = 0 : i64, scratch_operands = 0 : i64, tpu.core_type = #tpu.core_type<tc>, window_params = [{transform_indices = @transform_0, window_bounds = array<i64: 1, 4, 256>}, {transform_indices = @transform_1, window_bounds = array<i64: 2, 4>}, {transform_indices = @transform_2, window_bounds = array<i64: 4, 2>}, {pipeline_mode = #tpu.pipeline_mode<synchronous>, transform_indices = @transform_3, window_bounds = array<i64: 4, 1>}, {pipeline_mode = #tpu.pipeline_mode<synchronous>, transform_indices = @transform_4, window_bounds = array<i64: 1, 256>}, {transform_indices = @transform_5, window_bounds = array<i64: 1, 4, 256>}]} {
    %c0 = arith.constant 0 : index
    %c0_0 = arith.constant 0 : index
    %c0_1 = arith.constant 0 : index
    %0 = vector.load %arg1[%c0, %c0_0, %c0_1] : memref<1x4x256xf32, #tpu.memory_space<vmem>>, vector<1x4x256xf32>
    %c0_2 = arith.constant 0 : index
    %c0_3 = arith.constant 0 : index
    %1 = vector.load %arg4[%c0_2, %c0_3] : memref<4x1xf32, #tpu.memory_space<vmem>>, vector<4x1xf32>
    %2 = vector.shape_cast %1 : vector<4x1xf32> to vector<1x4x1xf32>
    %3 = vector.broadcast %2 : vector<1x4x1xf32> to vector<1x4x256xf32>
    %4 = arith.mulf %0, %3 : vector<1x4x256xf32>
    %cst = arith.constant dense<0.000000e+00> : vector<1x256xf32>
    %5 = vector.multi_reduction <add>, %4, %cst [1] : vector<1x4x256xf32> to vector<1x256xf32>
    %6 = arith.negf %5 : vector<1x256xf32>
    %7 = math.exp %6 : vector<1x256xf32>
    %cst_4 = arith.constant 1.000000e+00 : f32
    %8 = vector.broadcast %cst_4 : f32 to vector<1x256xf32>
    %9 = arith.addf %8, %7 : vector<1x256xf32>
    %10 = arith.divf %8, %9 : vector<1x256xf32>
    %cst_5 = arith.constant 1.600000e+01 : f32
    %11 = vector.broadcast %cst_5 : f32 to vector<1x256xf32>
    %12 = arith.mulf %11, %10 : vector<1x256xf32>
    %cst_6 = arith.constant dense<0.000000e+00> : vector<1x4xf32>
    %13 = vector.multi_reduction <add>, %0, %cst_6 [2] : vector<1x4x256xf32> to vector<1x4xf32>
    %cst_7 = arith.constant 3.906250e-03 : f32
    %14 = vector.broadcast %cst_7 : f32 to vector<1x4xf32>
    %15 = arith.mulf %13, %14 : vector<1x4xf32>
    %c0_8 = arith.constant 0 : index
    %c0_9 = arith.constant 0 : index
    %16 = memref.load %arg2[%c0_8, %c0_9] : memref<2x4xf32, #tpu.memory_space<smem>>
    %17 = vector.extract_strided_slice %15 {offsets = [0, 0], sizes = [1, 1], strides = [1, 1]} : vector<1x4xf32> to vector<1x1xf32>
    %18 = vector.broadcast %16 : f32 to vector<1x1xf32>
    %19 = arith.mulf %18, %17 : vector<1x1xf32>
    %c0_10 = arith.constant 0 : index
    %c1 = arith.constant 1 : index
    %20 = memref.load %arg2[%c0_10, %c1] : memref<2x4xf32, #tpu.memory_space<smem>>
    %21 = vector.extract_strided_slice %15 {offsets = [0, 1], sizes = [1, 1], strides = [1, 1]} : vector<1x4xf32> to vector<1x1xf32>
    %22 = vector.broadcast %20 : f32 to vector<1x1xf32>
    %23 = arith.mulf %22, %21 : vector<1x1xf32>
    %c0_11 = arith.constant 0 : index
    %c2 = arith.constant 2 : index
    %24 = memref.load %arg2[%c0_11, %c2] : memref<2x4xf32, #tpu.memory_space<smem>>
    %25 = vector.extract_strided_slice %15 {offsets = [0, 2], sizes = [1, 1], strides = [1, 1]} : vector<1x4xf32> to vector<1x1xf32>
    %26 = vector.broadcast %24 : f32 to vector<1x1xf32>
    %27 = arith.mulf %26, %25 : vector<1x1xf32>
    %c0_12 = arith.constant 0 : index
    %c3 = arith.constant 3 : index
    %28 = memref.load %arg2[%c0_12, %c3] : memref<2x4xf32, #tpu.memory_space<smem>>
    %29 = vector.extract_strided_slice %15 {offsets = [0, 3], sizes = [1, 1], strides = [1, 1]} : vector<1x4xf32> to vector<1x1xf32>
    %30 = vector.broadcast %28 : f32 to vector<1x1xf32>
    %31 = arith.mulf %30, %29 : vector<1x1xf32>
    %32 = arith.addf %19, %23 : vector<1x1xf32>
    %33 = arith.addf %27, %31 : vector<1x1xf32>
    %34 = arith.addf %32, %33 : vector<1x1xf32>
    %cst_13 = arith.constant 0.000000e+00 : f32
    %35 = vector.broadcast %cst_13 : f32 to vector<1x1xf32>
    %36 = arith.maximumf %34, %35 : vector<1x1xf32>
    %c1_14 = arith.constant 1 : index
    %c0_15 = arith.constant 0 : index
    %37 = memref.load %arg2[%c1_14, %c0_15] : memref<2x4xf32, #tpu.memory_space<smem>>
    %38 = vector.extract_strided_slice %15 {offsets = [0, 0], sizes = [1, 1], strides = [1, 1]} : vector<1x4xf32> to vector<1x1xf32>
    %39 = vector.broadcast %37 : f32 to vector<1x1xf32>
    %40 = arith.mulf %39, %38 : vector<1x1xf32>
    %c1_16 = arith.constant 1 : index
    %c1_17 = arith.constant 1 : index
    %41 = memref.load %arg2[%c1_16, %c1_17] : memref<2x4xf32, #tpu.memory_space<smem>>
    %42 = vector.extract_strided_slice %15 {offsets = [0, 1], sizes = [1, 1], strides = [1, 1]} : vector<1x4xf32> to vector<1x1xf32>
    %43 = vector.broadcast %41 : f32 to vector<1x1xf32>
    %44 = arith.mulf %43, %42 : vector<1x1xf32>
    %c1_18 = arith.constant 1 : index
    %c2_19 = arith.constant 2 : index
    %45 = memref.load %arg2[%c1_18, %c2_19] : memref<2x4xf32, #tpu.memory_space<smem>>
    %46 = vector.extract_strided_slice %15 {offsets = [0, 2], sizes = [1, 1], strides = [1, 1]} : vector<1x4xf32> to vector<1x1xf32>
    %47 = vector.broadcast %45 : f32 to vector<1x1xf32>
    %48 = arith.mulf %47, %46 : vector<1x1xf32>
    %c1_20 = arith.constant 1 : index
    %c3_21 = arith.constant 3 : index
    %49 = memref.load %arg2[%c1_20, %c3_21] : memref<2x4xf32, #tpu.memory_space<smem>>
    %50 = vector.extract_strided_slice %15 {offsets = [0, 3], sizes = [1, 1], strides = [1, 1]} : vector<1x4xf32> to vector<1x1xf32>
    %51 = vector.broadcast %49 : f32 to vector<1x1xf32>
    %52 = arith.mulf %51, %50 : vector<1x1xf32>
    %53 = arith.addf %40, %44 : vector<1x1xf32>
    %54 = arith.addf %48, %52 : vector<1x1xf32>
    %55 = arith.addf %53, %54 : vector<1x1xf32>
    %cst_22 = arith.constant 0.000000e+00 : f32
    %56 = vector.broadcast %cst_22 : f32 to vector<1x1xf32>
    %57 = arith.maximumf %55, %56 : vector<1x1xf32>
    %c0_23 = arith.constant 0 : index
    %c0_24 = arith.constant 0 : index
    %58 = memref.load %arg3[%c0_23, %c0_24] : memref<4x2xf32, #tpu.memory_space<smem>>
    %59 = vector.broadcast %58 : f32 to vector<1x1xf32>
    %60 = arith.mulf %59, %36 : vector<1x1xf32>
    %c0_25 = arith.constant 0 : index
    %c1_26 = arith.constant 1 : index
    %61 = memref.load %arg3[%c0_25, %c1_26] : memref<4x2xf32, #tpu.memory_space<smem>>
    %62 = vector.broadcast %61 : f32 to vector<1x1xf32>
    %63 = arith.mulf %62, %57 : vector<1x1xf32>
    %64 = arith.addf %60, %63 : vector<1x1xf32>
    %65 = arith.negf %64 : vector<1x1xf32>
    %66 = math.exp %65 : vector<1x1xf32>
    %cst_27 = arith.constant 1.000000e+00 : f32
    %67 = vector.broadcast %cst_27 : f32 to vector<1x1xf32>
    %68 = arith.addf %67, %66 : vector<1x1xf32>
    %69 = arith.divf %67, %68 : vector<1x1xf32>
    %cst_28 = arith.constant 1.600000e+01 : f32
    %70 = vector.broadcast %cst_28 : f32 to vector<1x1xf32>
    %71 = arith.mulf %70, %69 : vector<1x1xf32>
    %c1_29 = arith.constant 1 : index
    %c0_30 = arith.constant 0 : index
    %72 = memref.load %arg3[%c1_29, %c0_30] : memref<4x2xf32, #tpu.memory_space<smem>>
    %73 = vector.broadcast %72 : f32 to vector<1x1xf32>
    %74 = arith.mulf %73, %36 : vector<1x1xf32>
    %c1_31 = arith.constant 1 : index
    %c1_32 = arith.constant 1 : index
    %75 = memref.load %arg3[%c1_31, %c1_32] : memref<4x2xf32, #tpu.memory_space<smem>>
    %76 = vector.broadcast %75 : f32 to vector<1x1xf32>
    %77 = arith.mulf %76, %57 : vector<1x1xf32>
    %78 = arith.addf %74, %77 : vector<1x1xf32>
    %79 = arith.negf %78 : vector<1x1xf32>
    %80 = math.exp %79 : vector<1x1xf32>
    %cst_33 = arith.constant 1.000000e+00 : f32
    %81 = vector.broadcast %cst_33 : f32 to vector<1x1xf32>
    %82 = arith.addf %81, %80 : vector<1x1xf32>
    %83 = arith.divf %81, %82 : vector<1x1xf32>
    %cst_34 = arith.constant 1.600000e+01 : f32
    %84 = vector.broadcast %cst_34 : f32 to vector<1x1xf32>
    %85 = arith.mulf %84, %83 : vector<1x1xf32>
    %c2_35 = arith.constant 2 : index
    %c0_36 = arith.constant 0 : index
    %86 = memref.load %arg3[%c2_35, %c0_36] : memref<4x2xf32, #tpu.memory_space<smem>>
    %87 = vector.broadcast %86 : f32 to vector<1x1xf32>
    %88 = arith.mulf %87, %36 : vector<1x1xf32>
    %c2_37 = arith.constant 2 : index
    %c1_38 = arith.constant 1 : index
    %89 = memref.load %arg3[%c2_37, %c1_38] : memref<4x2xf32, #tpu.memory_space<smem>>
    %90 = vector.broadcast %89 : f32 to vector<1x1xf32>
    %91 = arith.mulf %90, %57 : vector<1x1xf32>
    %92 = arith.addf %88, %91 : vector<1x1xf32>
    %93 = arith.negf %92 : vector<1x1xf32>
    %94 = math.exp %93 : vector<1x1xf32>
    %cst_39 = arith.constant 1.000000e+00 : f32
    %95 = vector.broadcast %cst_39 : f32 to vector<1x1xf32>
    %96 = arith.addf %95, %94 : vector<1x1xf32>
    %97 = arith.divf %95, %96 : vector<1x1xf32>
    %cst_40 = arith.constant 1.600000e+01 : f32
    %98 = vector.broadcast %cst_40 : f32 to vector<1x1xf32>
    %99 = arith.mulf %98, %97 : vector<1x1xf32>
    %c3_41 = arith.constant 3 : index
    %c0_42 = arith.constant 0 : index
    %100 = memref.load %arg3[%c3_41, %c0_42] : memref<4x2xf32, #tpu.memory_space<smem>>
    %101 = vector.broadcast %100 : f32 to vector<1x1xf32>
    %102 = arith.mulf %101, %36 : vector<1x1xf32>
    %c3_43 = arith.constant 3 : index
    %c1_44 = arith.constant 1 : index
    %103 = memref.load %arg3[%c3_43, %c1_44] : memref<4x2xf32, #tpu.memory_space<smem>>
    %104 = vector.broadcast %103 : f32 to vector<1x1xf32>
    %105 = arith.mulf %104, %57 : vector<1x1xf32>
    %106 = arith.addf %102, %105 : vector<1x1xf32>
    %107 = arith.negf %106 : vector<1x1xf32>
    %108 = math.exp %107 : vector<1x1xf32>
    %cst_45 = arith.constant 1.000000e+00 : f32
    %109 = vector.broadcast %cst_45 : f32 to vector<1x1xf32>
    %110 = arith.addf %109, %108 : vector<1x1xf32>
    %111 = arith.divf %109, %110 : vector<1x1xf32>
    %cst_46 = arith.constant 1.600000e+01 : f32
    %112 = vector.broadcast %cst_46 : f32 to vector<1x1xf32>
    %113 = arith.mulf %112, %111 : vector<1x1xf32>
    %c0_47 = arith.constant 0 : index
    %c0_48 = arith.constant 0 : index
    %114 = vector.load %arg5[%c0_47, %c0_48] : memref<1x256xi32, #tpu.memory_space<vmem>>, vector<1x256xi32>
    %c0_i32 = arith.constant 0 : i32
    %115 = vector.broadcast %c0_i32 : i32 to vector<1x256xi32>
    %116 = arith.cmpi eq, %114, %115 : vector<1x256xi32>
    %cst_49 = arith.constant 0.000000e+00 : f32
    %117 = vector.shape_cast %71 : vector<1x1xf32> to vector<1x1xf32>
    %118 = vector.broadcast %117 : vector<1x1xf32> to vector<1x256xf32>
    %119 = vector.broadcast %cst_49 : f32 to vector<1x256xf32>
    %120 = arith.select %116, %118, %119 : vector<1x256xi1>, vector<1x256xf32>
    %c1_i32 = arith.constant 1 : i32
    %121 = vector.broadcast %c1_i32 : i32 to vector<1x256xi32>
    %122 = arith.cmpi eq, %114, %121 : vector<1x256xi32>
    %123 = vector.shape_cast %85 : vector<1x1xf32> to vector<1x1xf32>
    %124 = vector.broadcast %123 : vector<1x1xf32> to vector<1x256xf32>
    %125 = arith.select %122, %124, %120 : vector<1x256xi1>, vector<1x256xf32>
    %c2_i32 = arith.constant 2 : i32
    %126 = vector.broadcast %c2_i32 : i32 to vector<1x256xi32>
    %127 = arith.cmpi eq, %114, %126 : vector<1x256xi32>
    %128 = vector.shape_cast %99 : vector<1x1xf32> to vector<1x1xf32>
    %129 = vector.broadcast %128 : vector<1x1xf32> to vector<1x256xf32>
    %130 = arith.select %127, %129, %125 : vector<1x256xi1>, vector<1x256xf32>
    %c3_i32 = arith.constant 3 : i32
    %131 = vector.broadcast %c3_i32 : i32 to vector<1x256xi32>
    %132 = arith.cmpi eq, %114, %131 : vector<1x256xi32>
    %133 = vector.shape_cast %113 : vector<1x1xf32> to vector<1x1xf32>
    %134 = vector.broadcast %133 : vector<1x1xf32> to vector<1x256xf32>
    %135 = arith.select %132, %134, %130 : vector<1x256xi1>, vector<1x256xf32>
    %136 = arith.addf %135, %12 : vector<1x256xf32>
    %137 = vector.shape_cast %136 : vector<1x256xf32> to vector<1x1x256xf32>
    %138 = vector.shape_cast %137 : vector<1x1x256xf32> to vector<1x1x256xf32>
    %139 = vector.broadcast %138 : vector<1x1x256xf32> to vector<1x4x256xf32>
    %c0_50 = arith.constant 0 : index
    %c0_51 = arith.constant 0 : index
    %c0_52 = arith.constant 0 : index
    %140 = vector.load %arg6[%c0_50, %c0_51, %c0_52] : memref<1x4x256xf32, #tpu.memory_space<vmem>>, vector<1x4x256xf32>
    tpu.vector_store %arg6[%c0_50, %c0_51, %c0_52], %139 {strides = array<i32>} : memref<1x4x256xf32, #tpu.memory_space<vmem>>, vector<1x4x256xf32>,
    return
  }
  func.func @transform_0(%arg0: i32) -> (i32, i32, i32) {
    %c0_i32 = arith.constant 0 : i32
    %c0_i32_0 = arith.constant 0 : i32
    %c0_i32_1 = arith.constant 0 : i32
    return %arg0, %c0_i32, %c0_i32_0 : i32, i32, i32
  }
  func.func @transform_1(%arg0: i32) -> (i32, i32) {
    %c0_i32 = arith.constant 0 : i32
    %c0_i32_0 = arith.constant 0 : i32
    %c0_i32_1 = arith.constant 0 : i32
    return %c0_i32, %c0_i32_0 : i32, i32
  }
  func.func @transform_2(%arg0: i32) -> (i32, i32) {
    %c0_i32 = arith.constant 0 : i32
    %c0_i32_0 = arith.constant 0 : i32
    %c0_i32_1 = arith.constant 0 : i32
    return %c0_i32, %c0_i32_0 : i32, i32
  }
  func.func @transform_3(%arg0: i32) -> (i32, i32) {
    %c0_i32 = arith.constant 0 : i32
    %c0_i32_0 = arith.constant 0 : i32
    %c0_i32_1 = arith.constant 0 : i32
    return %c0_i32, %c0_i32_0 : i32, i32
  }
  func.func @transform_4(%arg0: i32) -> (i32, i32) {
    %c0_i32 = arith.constant 0 : i32
    %c0_i32_0 = arith.constant 0 : i32
    %c0_i32_1 = arith.constant 0 : i32
    return %c0_i32, %c0_i32_0 : i32, i32
  }
  func.func @transform_5(%arg0: i32) -> (i32, i32, i32) {
    %c0_i32 = arith.constant 0 : i32
    %c0_i32_0 = arith.constant 0 : i32
    %c0_i32_1 = arith.constant 0 : i32
    return %arg0, %c0_i32, %c0_i32_0 : i32, i32, i32
  }
}

</mosaic_0001>

<llo_original>
// kernel: tpu_custom_call.1
$region0: #{tpu_custom_call.1}
  #allocation0 [shape = 'u32[]', space=smem, size = 0x4, offset = 0x4, fixed_abs, tag = 'smem constant byte address 0x4 - core index']
  #allocation1 [shape = 'u32[144,128]{1,0:T(1,128)}', space=vmem, size = 0x12000, scoped, tag = 'internal scratch']
  %s0 = inlined_call_operand.hbm [shape: f32[2,4,256], index: 0, kind: input, shape index: {}]
  %s1 = inlined_call_operand.vmem [shape: f32[2,4], index: 1, kind: input, shape index: {}]
  %s2 = inlined_call_operand.vmem [shape: f32[4,2], index: 2, kind: input, shape index: {}]
  %s3 = inlined_call_operand.vmem [shape: f32[4,1], index: 3, kind: input, shape index: {}]
  %s4 = inlined_call_operand.vmem [shape: s32[1,256], index: 4, kind: input, shape index: {}]
  %s5 = inlined_call_operand.hbm [shape: f32[2,4,256], index: 5, kind: output, shape index: {}]
  %s6 = sld [smem:[#allocation0]]
  $region65: #{tpu_custom_call.1} parent=0
    _
  %s8 = ssub.s32 1, %s6
  %s9 = scalar_select 0, %s8, %s6
  $region1: #{tpu_custom_call.1} parent=0
    #allocation2 [shape = 'u8[8192]{0}', space=vmem, size = 0x2000, scoped, tag = 'input window, operand 0']
    #allocation3 [shape = 's32[2]{0}', space=sflag, size = 0x8, scoped, tag = 'scoped memory for tpu_custom_call.1']
    #allocation4 [shape = 's32[2]{0}', space=sflag, size = 0x8, scoped, tag = 'scoped memory for tpu_custom_call.1']
    #allocation5 [shape = 's32[2]{0}', space=sflag, size = 0x8, scoped, tag = 'scoped memory for tpu_custom_call.1']
    #allocation6 [shape = 'u8[1024]{0}', space=smem, size = 0x400, scoped, tag = 'input window, operand 1, single buffered']
    #allocation7 [shape = 'u8[2048]{0}', space=smem, size = 0x800, scoped, tag = 'input window, operand 2, single buffered']
    #allocation8 [shape = 's32[1]{0}', space=sflag, size = 0x4, scoped, tag = 'scoped memory for tpu_custom_call.1']
    #allocation9 [shape = 'u8[8192]{0}', space=vmem, size = 0x2000, scoped, tag = 'output window, operand 0']
    %10 = vsyncpa [#allocation3], 0
    %s11 = scalar_lea.sflag [#allocation3], 1
    %12 = vsyncpa %s11, 0
    %13 = vsyncpa [#allocation5], 0
    %14 = vsyncpa [#allocation8], 0
    %15 = vsyncpa [#allocation4], 0
    %s16 = scalar_lea.sflag [#allocation4], 1
    %17 = vsyncpa %s16, 0
    loop: start=0, step=1, limit=4
    $region2: #{tpu_custom_call.1} parent=1 // loop_pre_header
      _
    $region3: #{tpu_custom_call.1} parent=1 // loop_header
      %s19 = sphi 0, %s23
      %p20 = scmp.ge.s32.totalorder %s19, 4
      %s29 = sphi 0, %s31
      %s32 = sphi 0, %s29
      %s33 = sphi 0, %s32
      %s49 = sphi 0, %s33
      %s53 = sphi 0, %s53
      %s55 = sphi 0, %s53
      %s56 = sphi 0, %s55
      %s70 = sphi 0, %s56
      %s74 = sphi 0, %s74
      %s76 = sphi 0, %s74
      %s77 = sphi 0, %s76
      %s91 = sphi 0, %s77
      %s95 = sphi 0, %s95
      %s97 = sphi 0, %s95
      %s98 = sphi 0, %s97
      %s112 = sphi 0, %s98
      %s116 = sphi 0, %s116
      %s118 = sphi 0, %s116
      %s119 = sphi 0, %s118
      %s133 = sphi 0, %s119
      %s139 = sphi 0, %s141
      %s142 = sphi 0, %s139
      %s143 = sphi 0, %s142
      %s159 = sphi 0, %s143
    $region4: #{tpu_custom_call.1} parent=1 // loop_header_branch
      %22 = sbr.rel (%p20) target = $region8
    $region5: #{tpu_custom_call.1} parent=1 // loop_body
      %s24 = ssub.s32 %s19, 1
      %s25 = ssub.s32 %s19, 2
      %s26 = sadd.s32 %s19, 1
      %s27 = ssub.s32 %s19, %s26
      %p28 = scmp.eq.s32.totalorder %s27, 0
      %s30 = sadd.s32 %s29, 1
      %s31 = scalar_select %p28, %s29, %s30
      %p34 = pneg %p28
      %p35 = scmp.eq.s32.totalorder %s19, 1
      %p36 = por %p34, %p35
      %p37 = scmp.ne.s32.totalorder %s29, %s32
      %p38 = scmp.eq.s32.totalorder %s19, 0
      %p39 = por %p37, %p38
      %p40 = scmp.ne.s32.totalorder %s29, %s32
      %p41 = scmp.eq.s32.totalorder %s24, 1
      %p42 = por %p40, %p41
      %p43 = scmp.ne.s32.totalorder %s32, %s33
      %p44 = scmp.eq.s32.totalorder %s24, 0
      %p45 = por %p43, %p44
      %p46 = scmp.ne.s32.totalorder %s32, %s33
      %p47 = scmp.eq.s32.totalorder %s25, 1
      %p48 = por %p46, %p47
      %p50 = scmp.ne.s32.totalorder %s33, %s49
      %p51 = scmp.eq.s32.totalorder %s25, 0
      %p52 = por %p50, %p51
      %s54 = sadd.s32 %s53, 1
      %p57 = scmp.eq.s32.totalorder %s19, 1
      %p58 = scmp.ne.s32.totalorder %s53, %s55
      %p59 = scmp.eq.s32.totalorder %s19, 0
      %p60 = por %p58, %p59
      %p61 = scmp.ne.s32.totalorder %s53, %s55
      %p62 = scmp.eq.s32.totalorder %s24, 1
      %p63 = por %p61, %p62
      %p64 = scmp.ne.s32.totalorder %s55, %s56
      %p65 = scmp.eq.s32.totalorder %s24, 0
      %p66 = por %p64, %p65
      %p67 = scmp.ne.s32.totalorder %s55, %s56
      %p68 = scmp.eq.s32.totalorder %s25, 1
      %p69 = por %p67, %p68
      %p71 = scmp.ne.s32.totalorder %s56, %s70
      %p72 = scmp.eq.s32.totalorder %s25, 0
      %p73 = por %p71, %p72
      %s75 = sadd.s32 %s74, 1
      %p78 = scmp.eq.s32.totalorder %s19, 1
      %p79 = scmp.ne.s32.totalorder %s74, %s76
      %p80 = scmp.eq.s32.totalorder %s19, 0
      %p81 = por %p79, %p80
      %p82 = scmp.ne.s32.totalorder %s74, %s76
      %p83 = scmp.eq.s32.totalorder %s24, 1
      %p84 = por %p82, %p83
      %p85 = scmp.ne.s32.totalorder %s76, %s77
      %p86 = scmp.eq.s32.totalorder %s24, 0
      %p87 = por %p85, %p86
      %p88 = scmp.ne.s32.totalorder %s76, %s77
      %p89 = scmp.eq.s32.totalorder %s25, 1
      %p90 = por %p88, %p89
      %p92 = scmp.ne.s32.totalorder %s77, %s91
      %p93 = scmp.eq.s32.totalorder %s25, 0
      %p94 = por %p92, %p93
      %s96 = sadd.s32 %s95, 1
      %p99 = scmp.eq.s32.totalorder %s19, 1
      %p100 = scmp.ne.s32.totalorder %s95, %s97
      %p101 = scmp.eq.s32.totalorder %s19, 0
      %p102 = por %p100, %p101
      %p103 = scmp.ne.s32.totalorder %s95, %s97
      %p104 = scmp.eq.s32.totalorder %s24, 1
      %p105 = por %p103, %p104
      %p106 = scmp.ne.s32.totalorder %s97, %s98
      %p107 = scmp.eq.s32.totalorder %s24, 0
      %p108 = por %p106, %p107
      %p109 = scmp.ne.s32.totalorder %s97, %s98
      %p110 = scmp.eq.s32.totalorder %s25, 1
      %p111 = por %p109, %p110
      %p113 = scmp.ne.s32.totalorder %s98, %s112
      %p114 = scmp.eq.s32.totalorder %s25, 0
      %p115 = por %p113, %p114
      %s117 = sadd.s32 %s116, 1
      %p120 = scmp.eq.s32.totalorder %s19, 1
      %p121 = scmp.ne.s32.totalorder %s116, %s118
      %p122 = scmp.eq.s32.totalorder %s19, 0
      %p123 = por %p121, %p122
      %p124 = scmp.ne.s32.totalorder %s116, %s118
      %p125 = scmp.eq.s32.totalorder %s24, 1
      %p126 = por %p124, %p125
      %p127 = scmp.ne.s32.totalorder %s118, %s119
      %p128 = scmp.eq.s32.totalorder %s24, 0
      %p129 = por %p127, %p128
      %p130 = scmp.ne.s32.totalorder %s118, %s119
      %p131 = scmp.eq.s32.totalorder %s25, 1
      %p132 = por %p130, %p131
      %p134 = scmp.ne.s32.totalorder %s119, %s133
      %p135 = scmp.eq.s32.totalorder %s25, 0
      %p136 = por %p134, %p135
      %s137 = ssub.s32 %s19, %s26
      %p138 = scmp.eq.s32.totalorder %s137, 0
      %s140 = sadd.s32 %s139, 1
      %s141 = scalar_select %p138, %s139, %s140
      %p144 = pneg %p138
      %p145 = scmp.eq.s32.totalorder %s19, 1
      %p146 = por %p144, %p145
      %p147 = scmp.ne.s32.totalorder %s139, %s142
      %p148 = scmp.eq.s32.totalorder %s19, 0
      %p149 = por %p147, %p148
      %p150 = scmp.ne.s32.totalorder %s139, %s142
      %p151 = scmp.eq.s32.totalorder %s24, 1
      %p152 = por %p150, %p151
      %p153 = scmp.ne.s32.totalorder %s142, %s143
      %p154 = scmp.eq.s32.totalorder %s24, 0
      %p155 = por %p153, %p154
      %p156 = scmp.ne.s32.totalorder %s142, %s143
      %p157 = scmp.eq.s32.totalorder %s25, 1
      %p158 = por %p156, %p157
      %p160 = scmp.ne.s32.totalorder %s143, %s159
      %p161 = scmp.eq.s32.totalorder %s25, 0
      %p162 = por %p160, %p161
      %p163 = scmp.le.s32.totalorder 1, %s19
      %p164 = scmp.lt.s32.totalorder %s19, 3
      %p165 = pnand %p163, %p164
      %p166 = pneg %p165
      // Predicated region
      $region9: #{tpu_custom_call.1} parent=5 // pred_check
        _
      $region10: #{tpu_custom_call.1} parent=5 // pred_check_branch
        %168 = sbr.rel (%p165) target = $region12
      $region11: #{tpu_custom_call.1} parent=5 // pred_region
        %s169 = ssub.s32 %s19, 1
        // Predicated region
        $region13: #{tpu_custom_call.1} parent=11 // pred_check
          %p170 = pneg %p66
        $region14: #{tpu_custom_call.1} parent=11 // pred_check_branch
          %172 = sbr.rel (%p170) target = $region16
        $region15: #{tpu_custom_call.1} parent=11 // pred_region
          %s174 = ssub.s32 32, 32
          %175 = vsyncadd [#allocation5], %s174
          %s177 = sshll.u32 %s1, 4
          %s178 = int_to_ptr.vmem [resolvable:$true] %s177
          %180 = dma.vmem_to_smem %s178, 32, [#allocation6], [#allocation5]
        $region16: #{tpu_custom_call.1} parent=11 // pred_fallthru
          _
        // Predicated region
        $region17: #{tpu_custom_call.1} parent=11 // pred_check
          %p181 = pneg %p87
        $region18: #{tpu_custom_call.1} parent=11 // pred_check_branch
          %183 = sbr.rel (%p181) target = $region20
        $region19: #{tpu_custom_call.1} parent=11 // pred_region
          %s185 = ssub.s32 64, 64
          %186 = vsyncadd [#allocation8], %s185
          %s188 = sshll.u32 %s2, 4
          %s189 = int_to_ptr.vmem [resolvable:$true] %s188
          %191 = dma.vmem_to_smem %s189, 64, [#allocation7], [#allocation8]
        $region20: #{tpu_custom_call.1} parent=11 // pred_fallthru
          _
        // Predicated region
        $region21: #{tpu_custom_call.1} parent=11 // pred_check
          %p192 = pneg %p108
        $region22: #{tpu_custom_call.1} parent=11 // pred_check_branch
          %194 = sbr.rel (%p192) target = $region24
        $region23: #{tpu_custom_call.1} parent=11 // pred_region
          _
        $region24: #{tpu_custom_call.1} parent=11 // pred_fallthru
          _
        // Predicated region
        $region25: #{tpu_custom_call.1} parent=11 // pred_check
          %p195 = pneg %p129
        $region26: #{tpu_custom_call.1} parent=11 // pred_check_branch
          %197 = sbr.rel (%p195) target = $region28
        $region27: #{tpu_custom_call.1} parent=11 // pred_region
          _
        $region28: #{tpu_custom_call.1} parent=11 // pred_fallthru
          _
      $region12: #{tpu_custom_call.1} parent=5 // pred_fallthru
        _
      %p198 = scmp.lt.s32.totalorder %s19, 2
      // Predicated region
      $region29: #{tpu_custom_call.1} parent=5 // pred_check
        %p199 = pneg %p198
      $region30: #{tpu_custom_call.1} parent=5 // pred_check_branch
        %201 = sbr.rel (%p199) target = $region32
      $region31: #{tpu_custom_call.1} parent=5 // pred_region
        // Predicated region
        $region33: #{tpu_custom_call.1} parent=31 // pred_check
          %p202 = pneg %p39
        $region34: #{tpu_custom_call.1} parent=31 // pred_check_branch
          %204 = sbr.rel (%p202) target = $region36
        $region35: #{tpu_custom_call.1} parent=31 // pred_region
          %s205 = sand.u32 %s29, 1
          %s206 = scalar_lea.sflag [#allocation3], %s205
          %s207 = sand.u32 %s29, 1
          %s208 = smul.addr %s207, 8
          %s209 = scalar_lea.vmem [#allocation2], %s208
          %s211 = ssub.s32 128, 128
          %212 = vsyncadd %s206, %s211
          %s213 = smul.addr %s19, 2
          %s214 = smul.addr %s213, 64
          %s215 = scalar_lea.hbm %s0, %s214
          %s217 = sshll.u32 %s209, 4
          %s218 = int_to_ptr.vmem [resolvable:$true] %s217
          %220 = dma.hbm_to_vmem [thread:$0]  %s215, 128, %s218, %s206
        $region36: #{tpu_custom_call.1} parent=31 // pred_fallthru
          _
      $region32: #{tpu_custom_call.1} parent=5 // pred_fallthru
        _
      %p221 = scmp.le.s32.totalorder 1, %s19
      %p222 = scmp.lt.s32.totalorder %s19, 3
      %p223 = pnand %p221, %p222
      %p224 = pneg %p223
      // Predicated region
      $region37: #{tpu_custom_call.1} parent=5 // pred_check
        _
      $region38: #{tpu_custom_call.1} parent=5 // pred_check_branch
        %226 = sbr.rel (%p223) target = $region40
      $region39: #{tpu_custom_call.1} parent=5 // pred_region
        %s227 = ssub.s32 %s19, 1
        %s228 = sand.u32 %s32, 1
        %s229 = scalar_lea.sflag [#allocation3], %s228
        %s230 = sand.u32 %s32, 1
        %s231 = smul.addr %s230, 8
        %s232 = scalar_lea.vmem [#allocation2], %s231
        // Predicated region
        $region41: #{tpu_custom_call.1} parent=39 // pred_check
          %p233 = pneg %p45
        $region42: #{tpu_custom_call.1} parent=39 // pred_check_branch
          %235 = sbr.rel (%p233) target = $region44
        $region43: #{tpu_custom_call.1} parent=39 // pred_region
          %236 = dma.done %s229, 128
        $region44: #{tpu_custom_call.1} parent=39 // pred_fallthru
          _
        // Predicated region
        $region45: #{tpu_custom_call.1} parent=39 // pred_check
          %p237 = pneg %p66
        $region46: #{tpu_custom_call.1} parent=39 // pred_check_branch
          %239 = sbr.rel (%p237) target = $region48
        $region47: #{tpu_custom_call.1} parent=39 // pred_region
          %240 = dma.done [#allocation5], 32
        $region48: #{tpu_custom_call.1} parent=39 // pred_fallthru
          _
        // Predicated region
        $region49: #{tpu_custom_call.1} parent=39 // pred_check
          %p241 = pneg %p87
        $region50: #{tpu_custom_call.1} parent=39 // pred_check_branch
          %243 = sbr.rel (%p241) target = $region52
        $region51: #{tpu_custom_call.1} parent=39 // pred_region
          %244 = dma.done [#allocation8], 64
        $region52: #{tpu_custom_call.1} parent=39 // pred_fallthru
          _
        %245 = sfence
        %s246 = sand.u32 %s32, 1
        %s247 = scalar_lea.sflag [#allocation3], %s246
        %s248 = sand.u32 %s32, 1
        %s249 = smul.addr %s248, 8
        %s250 = scalar_lea.vmem [#allocation2], %s249
        %p251 = pneg %p45
        %p252 = pneg %p42
        %p253 = pneg %p66
        %p254 = pneg %p63
        %p255 = pneg %p87
        %p256 = pneg %p84
        %p257 = pneg %p108
        %p258 = pneg %p105
        %p259 = pneg %p129
        %p260 = pneg %p126
        %p261 = pneg %p155
        %p262 = pneg %p152
        %s263 = sand.u32 %s142, 1
        %s264 = scalar_lea.sflag [#allocation4], %s263
        %s265 = sand.u32 %s142, 1
        %s266 = smul.addr %s265, 8
        %s267 = scalar_lea.vmem [#allocation9], %s266
        %v268 = vld [vmem:[%s232] sm:$0xff]
        %v269 = vld [vmem:[%s3] sm:$0xf]
        %271 = vset.pattern.permute.xlu0 0
        %272 = vperm.xlu0 %271, %v269
        %v273 = vpop.permute.xlu0 %272
        %v275 = vunpack.c.l.s4 839922192
        %v276 = vunpack.c.0.s8 %v275
        %v277 = vlaneseq
        %v278 = vshrl.u32 %v277, 7
        %v279 = vsub.s32 %v276, %v278
        %v280 = vrot.slane %v273, %v279
        %v282 = vmul.f32 %v268, %v280
        %v284 = vcombine.high %v282, %v282
        %vm286 = vcmask 1043456
        %v287 = vsel %vm286, %v282, 0.0
        %v288 = vrot.slane %v287, 4
        %v289 = vadd.f32 %v287, %v288
        %v290 = vrot.slane %v289, 2
        %v291 = vadd.f32 %v289, %v290
        %v292 = vrot.slane %v291, 1
        %v293 = vadd.f32 %v291, %v292
        %v294 = vsel %vm286, %v284, 0.0
        %v295 = vrot.slane %v294, 4
        %v296 = vadd.f32 %v294, %v295
        %v297 = vrot.slane %v296, 2
        %v298 = vadd.f32 %v296, %v297
        %v299 = vrot.slane %v298, 1
        %v300 = vadd.f32 %v298, %v299
        %v301 = vxor.u32 %v293, 2147483648
        %v302 = vxor.u32 %v300, 2147483648
        %v303 = vmul.f32 %v301, 1.442695
        %v304 = vpow.pop %v303
        %v305 = vmul.f32 %v302, 1.442695
        %v306 = vpow.pop %v305
        %v307 = vadd.f32 %v304, 1.0
        %v308 = vadd.f32 %v306, 1.0
        %v309 = vrcp.pop %v307
        %v310 = vmul.f32 1.0, %v309
        %v311 = vrcp.pop %v308
        %v312 = vmul.f32 1.0, %v311
        %v313 = vmul.f32 %v310, 16.0
        %v314 = vmul.f32 %v312, 16.0
        %v316 = vcombine.high %v268, %v268
        %v318 = vsel %vm286, %v268, 0.0
        %v319 = vsel %vm286, %v316, 0.0
        %v320 = vadd.f32 %v318, %v319
        %321 = vadd.xlane.f32.xlu0 %v320
        %v322 = vpop.xlane.xlu0 %321
        %v323 = vmul.f32 %v322, 0.00390625
        %s324 = sld [smem:[#allocation6]]
        %v325 = vstv %s324
        %v326 = vmul.f32 %v325, %v323
        %s327 = sld [smem:[#allocation6 + $0x1]]
        %v328 = vstv %s327
        %v329 = vmul.f32 %v328, %v323
        %s330 = sld [smem:[#allocation6 + $0x2]]
        %v331 = vstv %s330
        %v332 = vmul.f32 %v331, %v323
        %s333 = sld [smem:[#allocation6 + $0x3]]
        %v334 = vstv %s333
        %v335 = vmul.f32 %v334, %v323
        %v337 = vrot.slane %v329, 1
        %v339 = vadd.f32 %v326, %v337
        %v341 = vrot.slane %v335, 1
        %v343 = vadd.f32 %v332, %v341
        %v345 = vrot.slane %v343, 2
        %v347 = vadd.f32 %v339, %v345
        %v348 = vmax.f32 %v347, 0.0
        %s349 = sld [smem:[#allocation6 + $0x80]]
        %v350 = vstv %s349
        %v351 = vmul.f32 %v350, %v323
        %s352 = sld [smem:[#allocation6 + $0x81]]
        %v353 = vstv %s352
        %v354 = vmul.f32 %v353, %v323
        %s355 = sld [smem:[#allocation6 + $0x82]]
        %v356 = vstv %s355
        %v357 = vmul.f32 %v356, %v323
        %s358 = sld [smem:[#allocation6 + $0x83]]
        %v359 = vstv %s358
        %v360 = vmul.f32 %v359, %v323
        %v362 = vrot.slane %v354, 1
        %v364 = vadd.f32 %v351, %v362
        %v366 = vrot.slane %v360, 1
        %v368 = vadd.f32 %v357, %v366
        %v370 = vrot.slane %v368, 2
        %v372 = vadd.f32 %v364, %v370
        %v373 = vmax.f32 %v372, 0.0
        %s374 = sld [smem:[#allocation7]]
        %v375 = vstv %s374
        %v376 = vmul.f32 %v375, %v348
        %s377 = sld [smem:[#allocation7 + $0x1]]
        %v378 = vstv %s377
        %v379 = vmul.f32 %v378, %v373
        %v380 = vadd.f32 %v376, %v379
        %v381 = vxor.u32 %v380, 2147483648
        %v382 = vmul.f32 %v381, 1.442695
        %v383 = vpow.pop %v382
        %v384 = vadd.f32 %v383, 1.0
        %v385 = vrcp.pop %v384
        %v386 = vmul.f32 1.0, %v385
        %v387 = vmul.f32 %v386, 16.0
        %s388 = sld [smem:[#allocation7 + $0x80]]
        %v389 = vstv %s388
        %v390 = vmul.f32 %v389, %v348
        %s391 = sld [smem:[#allocation7 + $0x81]]
        %v392 = vstv %s391
        %v393 = vmul.f32 %v392, %v373
        %v394 = vadd.f32 %v390, %v393
        %v395 = vxor.u32 %v394, 2147483648
        %v396 = vmul.f32 %v395, 1.442695
        %v397 = vpow.pop %v396
        %v398 = vadd.f32 %v397, 1.0
        %v399 = vrcp.pop %v398
        %v400 = vmul.f32 1.0, %v399
        %v401 = vmul.f32 %v400, 16.0
        %s402 = sld [smem:[#allocation7 + $0x100]]
        %v403 = vstv %s402
        %v404 = vmul.f32 %v403, %v348
        %s405 = sld [smem:[#allocation7 + $0x101]]
        %v406 = vstv %s405
        %v407 = vmul.f32 %v406, %v373
        %v408 = vadd.f32 %v404, %v407
        %v409 = vxor.u32 %v408, 2147483648
        %v410 = vmul.f32 %v409, 1.442695
        %v411 = vpow.pop %v410
        %v412 = vadd.f32 %v411, 1.0
        %v413 = vrcp.pop %v412
        %v414 = vmul.f32 1.0, %v413
        %v415 = vmul.f32 %v414, 16.0
        %s416 = sld [smem:[#allocation7 + $0x180]]
        %v417 = vstv %s416
        %v418 = vmul.f32 %v417, %v348
        %s419 = sld [smem:[#allocation7 + $0x181]]
        %v420 = vstv %s419
        %v421 = vmul.f32 %v420, %v373
        %v422 = vadd.f32 %v418, %v421
        %v423 = vxor.u32 %v422, 2147483648
        %v424 = vmul.f32 %v423, 1.442695
        %v425 = vpow.pop %v424
        %v426 = vadd.f32 %v425, 1.0
        %v427 = vrcp.pop %v426
        %v428 = vmul.f32 1.0, %v427
        %v429 = vmul.f32 %v428, 16.0
        %v430 = vld [vmem:[%s4] sm:$0x3]
        %vm431 = vcmp.eq.s32.totalorder %v430, 0
        %433 = vset.pattern.permute.xlu0 0
        %434 = vperm.xlu0 %433, %v387
        %v435 = vpop.permute.xlu0 %434
        %v436 = vlaneseq
        %v437 = vshrl.u32 %v436, 7
        %v438 = vsub.s32 0, %v437
        %v439 = vrot.slane %v435, %v438
        %v441 = vsel %vm431, %v439, 0.0
        %vm442 = vcmp.eq.s32.totalorder %v430, 1
        %444 = vset.pattern.permute.xlu0 0
        %445 = vperm.xlu0 %444, %v401
        %v446 = vpop.permute.xlu0 %445
        %v447 = vlaneseq
        %v448 = vshrl.u32 %v447, 7
        %v449 = vsub.s32 0, %v448
        %v450 = vrot.slane %v446, %v449
        %v452 = vsel %vm442, %v450, %v441
        %vm453 = vcmp.eq.s32.totalorder %v430, 2
        %455 = vset.pattern.permute.xlu0 0
        %456 = vperm.xlu0 %455, %v415
        %v457 = vpop.permute.xlu0 %456
        %v458 = vlaneseq
        %v459 = vshrl.u32 %v458, 7
        %v460 = vsub.s32 0, %v459
        %v461 = vrot.slane %v457, %v460
        %v463 = vsel %vm453, %v461, %v452
        %vm464 = vcmp.eq.s32.totalorder %v430, 3
        %466 = vset.pattern.permute.xlu0 0
        %467 = vperm.xlu0 %466, %v429
        %v468 = vpop.permute.xlu0 %467
        %v469 = vlaneseq
        %v470 = vshrl.u32 %v469, 7
        %v471 = vsub.s32 0, %v470
        %v472 = vrot.slane %v468, %v471
        %v474 = vsel %vm464, %v472, %v463
        %v477 = vcombine.low %v313, %v314
        %v479 = vunpack.c.l.s4 1966171168
        %v480 = vunpack.c.0.s8 %v479
        %v481 = vlaneseq
        %v482 = vshrl.u32 %v481, 7
        %v483 = vsub.s32 %v480, %v482
        %v484 = vrot.slane %v477, %v483
        %v486 = vunpack.c.l.s4 1966171168
        %v487 = vunpack.c.0.s8 %v486
        %v488 = vlaneseq
        %v489 = vshrl.u32 %v488, 7
        %v490 = vsub.s32 %v487, %v489
        %v491 = vrot.slane %v484, %v490
        %v493 = vadd.f32 %v474, %v491
        %v495 = vlaneseq
        %v496 = vshrl.u32 %v495, 7
        %v497 = vsub.s32 0, %v496
        %v498 = vrot.slane %v493, %v497
        %v499 = vlaneseq
        %v500 = vshrl.u32 %v499, 7
        %v501 = vsub.s32 1, %v500
        %v502 = vrot.slane %v493, %v501
        %v503 = vcombine.low %v498, %v502
        %505 = vst [vmem:[%s267] sm:$0xff] %v503
        %s506 = sand.u32 %s142, 1
        %s507 = scalar_lea.sflag [#allocation4], %s506
        %s508 = sand.u32 %s142, 1
        %s509 = smul.addr %s508, 8
        %s510 = scalar_lea.vmem [#allocation9], %s509
        // Predicated region
        $region53: #{tpu_custom_call.1} parent=39 // pred_check
          %p511 = pneg %p152
        $region54: #{tpu_custom_call.1} parent=39 // pred_check_branch
          %513 = sbr.rel (%p511) target = $region56
        $region55: #{tpu_custom_call.1} parent=39 // pred_region
          %s515 = ssub.s32 128, 128
          %516 = vsyncadd %s507, %s515
          %s517 = smul.addr %s24, 2
          %s518 = smul.addr %s517, 64
          %s519 = scalar_lea.hbm %s5, %s518
          %s521 = sshll.u32 %s510, 4
          %s522 = int_to_ptr.vmem [resolvable:$true] %s521
          %524 = dma.vmem_to_hbm [thread:$0]  %s522, 128, %s519, %s507
        $region56: #{tpu_custom_call.1} parent=39 // pred_fallthru
          _
      $region40: #{tpu_custom_call.1} parent=5 // pred_fallthru
        _
      %p525 = scmp.le.s32.totalorder 2, %s19
      // Predicated region
      $region57: #{tpu_custom_call.1} parent=5 // pred_check
        %p526 = pneg %p525
      $region58: #{tpu_custom_call.1} parent=5 // pred_check_branch
        %528 = sbr.rel (%p526) target = $region60
      $region59: #{tpu_custom_call.1} parent=5 // pred_region
        %s529 = ssub.s32 %s19, 2
        // Predicated region
        $region61: #{tpu_custom_call.1} parent=59 // pred_check
          %p530 = pneg %p158
        $region62: #{tpu_custom_call.1} parent=59 // pred_check_branch
          %532 = sbr.rel (%p530) target = $region64
        $region63: #{tpu_custom_call.1} parent=59 // pred_region
          %s533 = sand.u32 %s143, 1
          %s534 = scalar_lea.sflag [#allocation4], %s533
          %s535 = sand.u32 %s143, 1
          %s536 = smul.addr %s535, 8
          %s537 = scalar_lea.vmem [#allocation9], %s536
          %538 = dma.done %s534, 128
        $region64: #{tpu_custom_call.1} parent=59 // pred_fallthru
          _
      $region60: #{tpu_custom_call.1} parent=5 // pred_fallthru
        _
    $region6: #{tpu_custom_call.1} parent=1 // loop_footer
      %s23 = sadd.s32 1, %s19
    $region7: #{tpu_custom_call.1} parent=1 // loop_footer_branch
      %18 = sbr.rel target = $region3
    $region8: #{tpu_custom_call.1} parent=1 // loop_exit
      _
    %539 = vsyncpa [#allocation3], 1
    %s540 = scalar_lea.sflag [#allocation3], 1
    %541 = vsyncpa %s540, 1
    %542 = vsyncpa [#allocation4], 1
    %s543 = scalar_lea.sflag [#allocation4], 1
    %544 = vsyncpa %s543, 1
    %545 = vsyncpa [#allocation5], 1
    %s546 = scalar_lea.sflag [#allocation5], 1
    %547 = vsyncpa %s546, 1
    %548 = vsyncpa [#allocation8], 1

</llo_original>
